<compile_context>
chip_gen: v7x
topology: tpu7x:2x2x1
jax: 0.10.0
libtpu: 0.0.40
codegen_flags: <defaults>
</compile_context>

<pallas_src>
import jax
import jax.numpy as jnp
from jax import lax
from jax.experimental import pallas as pl
from jax.experimental.pallas import tpu as pltpu

_FUSED_SLAB_LIMIT_BYTES = 8 * 1024 * 1024   # per-batch (C, HW) VMEM slab cap
_TARGET_TILE_BYTES = 4 * 1024 * 1024        # per-step tile for the tiled passes
_VMEM_LIMIT_BYTES = 44 * 1024 * 1024        # < v7x 64 MiB physical, fine on v5e/v6e


def _round_up(x, m):
    return (x + m - 1) // m * m


def _pick_tile(total, unit, cap):
    """Largest multiple of `unit` dividing `total` and <= cap; falls back to the
    full extent when `total` isn't a multiple of `unit` (full blocks are legal)."""
    if total % unit != 0 or total <= unit:
        return total
    best = unit
    t = unit
    limit = min(total, max(cap, unit))
    while t <= limit:
        if total % t == 0:
            best = t
        t += unit
    return best


def _lane_chunk_sum(x2d):
    """Row sums of a 2-D f32 array: accumulate 128-lane chunks with VPU adds and
    do a single final 128->1 cross-lane (XLU) reduce, so the reduction never
    becomes XLU-bound at HBM streaming rates."""
    n = x2d.shape[-1]
    if n % 128 != 0 or n <= 128:
        return jnp.sum(x2d, axis=-1, keepdims=True)
    acc = x2d[:, 0:128]
    for j in range(1, n // 128):
        acc = acc + x2d[:, j * 128:(j + 1) * 128]
    return jnp.sum(acc, axis=-1, keepdims=True)


def se_block(x, w1, w2, *, max_row_tile=1024, max_hw_tile=8192,
             fused_slab_limit_bytes=_FUSED_SLAB_LIMIT_BYTES):
    """SE_Block.forward: x * sigmoid(fc2(relu(fc1(avgpool(x))))) + x.

    x : (B, C, H, W);  w1 : (C//r, C);  w2 : (C, C//r)   (nn.Linear, no bias).
    """
    B, C, H, W = x.shape
    C_red = w1.shape[0]
    HW = H * W
    R = B * C
    itemsize = x.dtype.itemsize
    inv_hw = 1.0 / float(HW)

    # Per-batch (C, HW) slab footprint in VMEM (sublane/lane padded).
    slab_vmem = _round_up(C, 8) * _round_up(HW, 128) * itemsize

    if slab_vmem <= fused_slab_limit_bytes:
        # ---- fused path: pool -> MLP -> scale on a resident per-batch slab --
        x3d = x.reshape(B, C, HW)

        def _fused_kernel(x_ref, w1_ref, w2_ref, o_ref):
            xf = x_ref[0].astype(jnp.float32)                        # (C, HW)
            y = _lane_chunk_sum(xf) * inv_hw                         # (C, 1)
            h = jnp.maximum(
                jnp.dot(w1_ref[...], y,
                        preferred_element_type=jnp.float32), 0.0)    # (C_red, 1)
            s = jax.nn.sigmoid(
                jnp.dot(w2_ref[...], h,
                        preferred_element_type=jnp.float32)) + 1.0   # (C, 1)
            o_ref[0] = (xf * s).astype(o_ref.dtype)                  # x*s + x

        out3d = pl.pallas_call(
            _fused_kernel,
            out_shape=jax.ShapeDtypeStruct((B, C, HW), x.dtype),
            grid=(B,),
            in_specs=[
                pl.BlockSpec((1, C, HW), lambda b: (b, 0, 0)),
                pl.BlockSpec((C_red, C), lambda b: (0, 0)),
                pl.BlockSpec((C, C_red), lambda b: (0, 0)),
            ],
            out_specs=pl.BlockSpec((1, C, HW), lambda b: (b, 0, 0)),
            compiler_params=pltpu.CompilerParams(
                dimension_semantics=("parallel",),
                vmem_limit_bytes=_VMEM_LIMIT_BYTES),
            cost_estimate=pl.CostEstimate(
                flops=2 * B * C * HW + 4 * B * C * C_red,
                transcendentals=B * C,
                bytes_accessed=2 * B * C * HW * itemsize
                               + 2 * C * C_red * w1.dtype.itemsize),
        )(x3d, w1, w2)
        return out3d.reshape(B, C, H, W)

    # ---- tiled 3-stage fallback for slabs too large to keep resident --------
    x2d = x.reshape(R, HW)

    # Lane tile: multiple of 128 when possible (full extent otherwise).
    ht = _pick_tile(HW, 128, max_hw_tile)
    # Row tile: size each step to ~TARGET bytes; keep >= 2 row tiles when
    # possible so the "parallel" rows axis shards across both v7x TensorCores.
    row_cap = max(8, _TARGET_TILE_BYTES // max(1, ht * itemsize))
    if R >= 16 and (R // 2) % 8 == 0:
        row_cap = min(row_cap, R // 2)
    row_cap = min(row_cap, max_row_tile)
    rt = _pick_tile(R, 8, row_cap)
    n_r, n_h = R // rt, HW // ht
    # TODO(synk): HW that is large and not a multiple of 128 falls back to a
    # full-extent lane tile; pad HW in the wrapper if that ever blows the
    # VMEM budget.

    acc_w = 128 if ht % 128 == 0 else 1

    # -- pass 1: global average pool (lane-preserving VPU accumulation) -------
    def _pool_kernel(x_ref, mean_ref, acc_ref):
        h = pl.program_id(1)

        @pl.when(h == 0)
        def _():
            acc_ref[...] = jnp.zeros_like(acc_ref)

        xf = x_ref[...].astype(jnp.float32)
        if acc_w == 128:
            partial = xf[:, 0:128]
            for j in range(1, ht // 128):
                partial = partial + xf[:, j * 128:(j + 1) * 128]
        else:
            partial = jnp.sum(xf, axis=-1, keepdims=True)
        acc_ref[...] += partial

        @pl.when(h == pl.num_programs(1) - 1)
        def _():
            mean_ref[...] = jnp.sum(acc_ref[...], axis=-1,
                                    keepdims=True) * inv_hw

    pooled = pl.pallas_call(
        _pool_kernel,
        out_shape=jax.ShapeDtypeStruct((R, 1), jnp.float32),
        grid=(n_r, n_h),
        in_specs=[pl.BlockSpec((rt, ht), lambda r, h: (r, h))],
        out_specs=pl.BlockSpec((rt, 1), lambda r, h: (r, 0)),
        scratch_shapes=[pltpu.VMEM((rt, acc_w), jnp.float32)],
        compiler_params=pltpu.CompilerParams(
            dimension_semantics=("parallel", "arbitrary"),
            vmem_limit_bytes=_VMEM_LIMIT_BYTES),
        cost_estimate=pl.CostEstimate(
            flops=R * HW, transcendentals=0,
            bytes_accessed=R * HW * itemsize + R * 4),
    )(x2d)

    # -- pass 2: tiny squeeze/excite MLP as plain XLA (no kernel launch) ------
    y = pooled.reshape(B, C)
    hmid = jnp.maximum(jnp.dot(y, w1.T, precision=lax.Precision.HIGHEST), 0.0)
    s = jax.nn.sigmoid(jnp.dot(hmid, w2.T, precision=lax.Precision.HIGHEST))
    scale = (s + 1.0).reshape(R, 1).astype(jnp.float32)  # residual folded in

    # -- pass 3: lane-dense, fully parallel elementwise scale -----------------
    def _scale_kernel(x_ref, s_ref, o_ref):
        o_ref[...] = (x_ref[...].astype(jnp.float32)
                      * s_ref[...]).astype(o_ref.dtype)

    out2d = pl.pallas_call(
        _scale_kernel,
        out_shape=jax.ShapeDtypeStruct((R, HW), x.dtype),
        grid=(n_r, n_h),
        in_specs=[
            pl.BlockSpec((rt, ht), lambda r, h: (r, h)),
            pl.BlockSpec((rt, 1), lambda r, h: (r, 0)),
        ],
        out_specs=pl.BlockSpec((rt, ht), lambda r, h: (r, h)),
        compiler_params=pltpu.CompilerParams(
            dimension_semantics=("parallel", "parallel"),
            vmem_limit_bytes=_VMEM_LIMIT_BYTES),
        cost_estimate=pl.CostEstimate(
            flops=R * HW, transcendentals=0,
            bytes_accessed=2 * R * HW * itemsize + R * 4),
    )(x2d, scale)

    return out2d.reshape(B, C, H, W)


def reference_se_block(x, w1, w2):
    y = jnp.mean(x, axis=(2, 3))                                     # (B, C)
    h = jnp.maximum(jnp.dot(y, w1.T, precision=lax.Precision.HIGHEST), 0.0)
    s = jax.nn.sigmoid(jnp.dot(h, w2.T, precision=lax.Precision.HIGHEST))
    return x * s[:, :, None, None] + x


if __name__ == "__main__":
    B, C, H, W = 2, 4, 16, 16
    reduction = 4
    C_red = C // reduction

    key = jax.random.PRNGKey(0)
    kx, k1, k2 = jax.random.split(key, 3)

    x = jax.random.normal(kx, (B, C, H, W), dtype=jnp.float32)
    # Weights shaped like nn.Linear(ch_in, ch_in//r) / nn.Linear(ch_in//r, ch_in)
    w1 = jax.random.normal(k1, (C_red, C), dtype=jnp.float32) * 0.5
    w2 = jax.random.normal(k2, (C, C_red), dtype=jnp.float32) * 0.5

    ref = reference_se_block(x, w1, w2)

    # Fused per-batch-slab path (the default dispatch for these shapes).
    out = jax.block_until_ready(se_block(x, w1, w2))
    assert jnp.allclose(out, ref, atol=1e-5, rtol=1e-5), "fused path mismatch"

    # Tiled 3-pass fallback (forced, to exercise the large-slab path too).
    out2 = jax.block_until_ready(se_block(x, w1, w2, fused_slab_limit_bytes=0))
    assert jnp.allclose(out2, ref, atol=1e-5, rtol=1e-5), "tiled path mismatch"

    print("KERNEL_OK")
</pallas_src>

<mosaic_0001>
module attributes {stable_mosaic.version = 11 : i64} {
  func.func @_fused_kernel(%arg0: i32, %arg1: memref<1x4x256xf32, #tpu.memory_space<vmem>>, %arg2: memref<1x4xf32, #tpu.memory_space<vmem>>, %arg3: memref<4x1xf32, #tpu.memory_space<vmem>>, %arg4: memref<1x4x256xf32, #tpu.memory_space<vmem>>) attributes {dimension_semantics = [#tpu.dimension_semantics<parallel>], iteration_bounds = array<i64: 2>, scalar_prefetch = 0 : i64, scratch_operands = 0 : i64, tpu.core_type = #tpu.core_type<tc>, window_params = [{transform_indices = @transform_0, window_bounds = array<i64: 1, 4, 256>}, {pipeline_mode = #tpu.pipeline_mode<synchronous>, transform_indices = @transform_1, window_bounds = array<i64: 1, 4>}, {pipeline_mode = #tpu.pipeline_mode<synchronous>, transform_indices = @transform_2, window_bounds = array<i64: 4, 1>}, {transform_indices = @transform_3, window_bounds = array<i64: 1, 4, 256>}]} {
    %c0 = arith.constant 0 : index
    %c0_0 = arith.constant 0 : index
    %c0_1 = arith.constant 0 : index
    %0 = vector.load %arg1[%c0, %c0_0, %c0_1] : memref<1x4x256xf32, #tpu.memory_space<vmem>>, vector<1x4x256xf32>
    %1 = vector.shape_cast %0 : vector<1x4x256xf32> to vector<4x256xf32>
    %2 = vector.extract_strided_slice %1 {offsets = [0, 0], sizes = [4, 128], strides = [1, 1]} : vector<4x256xf32> to vector<4x128xf32>
    %3 = vector.extract_strided_slice %1 {offsets = [0, 128], sizes = [4, 128], strides = [1, 1]} : vector<4x256xf32> to vector<4x128xf32>
    %4 = arith.addf %2, %3 : vector<4x128xf32>
    %cst = arith.constant dense<0.000000e+00> : vector<4xf32>
    %5 = vector.multi_reduction <add>, %4, %cst [1] : vector<4x128xf32> to vector<4xf32>
    %6 = vector.shape_cast %5 : vector<4xf32> to vector<4x1xf32>
    %cst_2 = arith.constant 3.906250e-03 : f32
    %7 = vector.broadcast %cst_2 : f32 to vector<4x1xf32>
    %8 = arith.mulf %6, %7 : vector<4x1xf32>
    %c0_3 = arith.constant 0 : index
    %c0_4 = arith.constant 0 : index
    %9 = vector.load %arg2[%c0_3, %c0_4] : memref<1x4xf32, #tpu.memory_space<vmem>>, vector<1x4xf32>
    %cst_5 = arith.constant dense<0.000000e+00> : vector<1x1xf32>
    %10 = tpu.matmul %9, %8, %cst_5 {dimension_numbers = #tpu.dot_dimension_numbers<[1], [0], [0], [1], [0, 0, 1, 1], [], []>} : vector<1x4xf32>, vector<4x1xf32>, vector<1x1xf32> -> vector<1x1xf32>
    %cst_6 = arith.constant 0.000000e+00 : f32
    %11 = vector.broadcast %cst_6 : f32 to vector<1x1xf32>
    %12 = arith.maximumf %10, %11 : vector<1x1xf32>
    %c0_7 = arith.constant 0 : index
    %c0_8 = arith.constant 0 : index
    %13 = vector.load %arg3[%c0_7, %c0_8] : memref<4x1xf32, #tpu.memory_space<vmem>>, vector<4x1xf32>
    %cst_9 = arith.constant dense<0.000000e+00> : vector<4x1xf32>
    %14 = tpu.matmul %13, %12, %cst_9 {dimension_numbers = #tpu.dot_dimension_numbers<[1], [0], [0], [1], [0, 0, 1, 1], [], []>} : vector<4x1xf32>, vector<1x1xf32>, vector<4x1xf32> -> vector<4x1xf32>
    %15 = arith.negf %14 : vector<4x1xf32>
    %16 = math.exp %15 : vector<4x1xf32>
    %cst_10 = arith.constant 1.000000e+00 : f32
    %17 = vector.broadcast %cst_10 : f32 to vector<4x1xf32>
    %18 = arith.addf %17, %16 : vector<4x1xf32>
    %19 = arith.divf %17, %18 : vector<4x1xf32>
    %cst_11 = arith.constant 1.000000e+00 : f32
    %20 = vector.broadcast %cst_11 : f32 to vector<4x1xf32>
    %21 = arith.addf %19, %20 : vector<4x1xf32>
    %22 = vector.broadcast %21 : vector<4x1xf32> to vector<4x256xf32>
    %23 = arith.mulf %1, %22 : vector<4x256xf32>
    %c0_12 = arith.constant 0 : index
    %c0_13 = arith.constant 0 : index
    %c0_14 = arith.constant 0 : index
    %24 = vector.load %arg4[%c0_12, %c0_13, %c0_14] : memref<1x4x256xf32, #tpu.memory_space<vmem>>, vector<1x4x256xf32>
    %25 = vector.shape_cast %24 : vector<1x4x256xf32> to vector<4x256xf32>
    %26 = vector.shape_cast %23 : vector<4x256xf32> to vector<1x4x256xf32>
    tpu.vector_store %arg4[%c0_12, %c0_13, %c0_14], %26 {strides = array<i32>} : memref<1x4x256xf32, #tpu.memory_space<vmem>>, vector<1x4x256xf32>,
    return
  }
  func.func @transform_0(%arg0: i32) -> (i32, i32, i32) {
    %c0_i32 = arith.constant 0 : i32
    %c0_i32_0 = arith.constant 0 : i32
    %c0_i32_1 = arith.constant 0 : i32
    return %arg0, %c0_i32, %c0_i32_0 : i32, i32, i32
  }
  func.func @transform_1(%arg0: i32) -> (i32, i32) {
    %c0_i32 = arith.constant 0 : i32
    %c0_i32_0 = arith.constant 0 : i32
    %c0_i32_1 = arith.constant 0 : i32
    return %c0_i32, %c0_i32_0 : i32, i32
  }
  func.func @transform_2(%arg0: i32) -> (i32, i32) {
    %c0_i32 = arith.constant 0 : i32
    %c0_i32_0 = arith.constant 0 : i32
    %c0_i32_1 = arith.constant 0 : i32
    return %c0_i32, %c0_i32_0 : i32, i32
  }
  func.func @transform_3(%arg0: i32) -> (i32, i32, i32) {
    %c0_i32 = arith.constant 0 : i32
    %c0_i32_0 = arith.constant 0 : i32
    %c0_i32_1 = arith.constant 0 : i32
    return %arg0, %c0_i32, %c0_i32_0 : i32, i32, i32
  }
}

</mosaic_0001>

<llo_original>
// kernel: tpu_custom_call.1
$region0: #{tpu_custom_call.1}
  #allocation0 [shape = 'u32[]', space=smem, size = 0x4, offset = 0x4, fixed_abs, tag = 'smem constant byte address 0x4 - core index']
  #allocation1 [shape = 'u32[144,128]{1,0:T(1,128)}', space=vmem, size = 0x12000, scoped, tag = 'internal scratch']
  %s0 = inlined_call_operand.hbm [shape: f32[2,4,256], index: 0, kind: input, shape index: {}]
  %s1 = inlined_call_operand.vmem [shape: f32[1,4], index: 1, kind: input, shape index: {}]
  %s2 = inlined_call_operand.vmem [shape: f32[4,1], index: 2, kind: input, shape index: {}]
  %s3 = inlined_call_operand.hbm [shape: f32[2,4,256], index: 3, kind: output, shape index: {}]
  %s4 = sld [smem:[#allocation0]]
  $region49: #{tpu_custom_call.1} parent=0
    _
  %s6 = ssub.s32 1, %s4
  %s7 = scalar_select 0, %s6, %s4
  $region1: #{tpu_custom_call.1} parent=0
    #allocation2 [shape = 'u8[8192]{0}', space=vmem, size = 0x2000, scoped, tag = 'input window, operand 0']
    #allocation3 [shape = 's32[2]{0}', space=sflag, size = 0x8, scoped, tag = 'scoped memory for tpu_custom_call.1']
    #allocation4 [shape = 's32[2]{0}', space=sflag, size = 0x8, scoped, tag = 'scoped memory for tpu_custom_call.1']
    #allocation5 [shape = 'u8[8192]{0}', space=vmem, size = 0x2000, scoped, tag = 'output window, operand 0']
    %8 = vsyncpa [#allocation3], 0
    %s9 = scalar_lea.sflag [#allocation3], 1
    %10 = vsyncpa %s9, 0
    %11 = vsyncpa [#allocation4], 0
    %s12 = scalar_lea.sflag [#allocation4], 1
    %13 = vsyncpa %s12, 0
    loop: start=0, step=1, limit=4
    $region2: #{tpu_custom_call.1} parent=1 // loop_pre_header
      _
    $region3: #{tpu_custom_call.1} parent=1 // loop_header
      %s15 = sphi 0, %s19
      %p16 = scmp.ge.s32.totalorder %s15, 4
      %s25 = sphi 0, %s27
      %s28 = sphi 0, %s25
      %s29 = sphi 0, %s28
      %s45 = sphi 0, %s29
      %s49 = sphi 0, %s49
      %s51 = sphi 0, %s49
      %s52 = sphi 0, %s51
      %s66 = sphi 0, %s52
      %s70 = sphi 0, %s70
      %s72 = sphi 0, %s70
      %s73 = sphi 0, %s72
      %s87 = sphi 0, %s73
      %s93 = sphi 0, %s95
      %s96 = sphi 0, %s93
      %s97 = sphi 0, %s96
      %s113 = sphi 0, %s97
    $region4: #{tpu_custom_call.1} parent=1 // loop_header_branch
      %18 = sbr.rel (%p16) target = $region8
    $region5: #{tpu_custom_call.1} parent=1 // loop_body
      %s20 = ssub.s32 %s15, 1
      %s21 = ssub.s32 %s15, 2
      %s22 = sadd.s32 %s15, 1
      %s23 = ssub.s32 %s15, %s22
      %p24 = scmp.eq.s32.totalorder %s23, 0
      %s26 = sadd.s32 %s25, 1
      %s27 = scalar_select %p24, %s25, %s26
      %p30 = pneg %p24
      %p31 = scmp.eq.s32.totalorder %s15, 1
      %p32 = por %p30, %p31
      %p33 = scmp.ne.s32.totalorder %s25, %s28
      %p34 = scmp.eq.s32.totalorder %s15, 0
      %p35 = por %p33, %p34
      %p36 = scmp.ne.s32.totalorder %s25, %s28
      %p37 = scmp.eq.s32.totalorder %s20, 1
      %p38 = por %p36, %p37
      %p39 = scmp.ne.s32.totalorder %s28, %s29
      %p40 = scmp.eq.s32.totalorder %s20, 0
      %p41 = por %p39, %p40
      %p42 = scmp.ne.s32.totalorder %s28, %s29
      %p43 = scmp.eq.s32.totalorder %s21, 1
      %p44 = por %p42, %p43
      %p46 = scmp.ne.s32.totalorder %s29, %s45
      %p47 = scmp.eq.s32.totalorder %s21, 0
      %p48 = por %p46, %p47
      %s50 = sadd.s32 %s49, 1
      %p53 = scmp.eq.s32.totalorder %s15, 1
      %p54 = scmp.ne.s32.totalorder %s49, %s51
      %p55 = scmp.eq.s32.totalorder %s15, 0
      %p56 = por %p54, %p55
      %p57 = scmp.ne.s32.totalorder %s49, %s51
      %p58 = scmp.eq.s32.totalorder %s20, 1
      %p59 = por %p57, %p58
      %p60 = scmp.ne.s32.totalorder %s51, %s52
      %p61 = scmp.eq.s32.totalorder %s20, 0
      %p62 = por %p60, %p61
      %p63 = scmp.ne.s32.totalorder %s51, %s52
      %p64 = scmp.eq.s32.totalorder %s21, 1
      %p65 = por %p63, %p64
      %p67 = scmp.ne.s32.totalorder %s52, %s66
      %p68 = scmp.eq.s32.totalorder %s21, 0
      %p69 = por %p67, %p68
      %s71 = sadd.s32 %s70, 1
      %p74 = scmp.eq.s32.totalorder %s15, 1
      %p75 = scmp.ne.s32.totalorder %s70, %s72
      %p76 = scmp.eq.s32.totalorder %s15, 0
      %p77 = por %p75, %p76
      %p78 = scmp.ne.s32.totalorder %s70, %s72
      %p79 = scmp.eq.s32.totalorder %s20, 1
      %p80 = por %p78, %p79
      %p81 = scmp.ne.s32.totalorder %s72, %s73
      %p82 = scmp.eq.s32.totalorder %s20, 0
      %p83 = por %p81, %p82
      %p84 = scmp.ne.s32.totalorder %s72, %s73
      %p85 = scmp.eq.s32.totalorder %s21, 1
      %p86 = por %p84, %p85
      %p88 = scmp.ne.s32.totalorder %s73, %s87
      %p89 = scmp.eq.s32.totalorder %s21, 0
      %p90 = por %p88, %p89
      %s91 = ssub.s32 %s15, %s22
      %p92 = scmp.eq.s32.totalorder %s91, 0
      %s94 = sadd.s32 %s93, 1
      %s95 = scalar_select %p92, %s93, %s94
      %p98 = pneg %p92
      %p99 = scmp.eq.s32.totalorder %s15, 1
      %p100 = por %p98, %p99
      %p101 = scmp.ne.s32.totalorder %s93, %s96
      %p102 = scmp.eq.s32.totalorder %s15, 0
      %p103 = por %p101, %p102
      %p104 = scmp.ne.s32.totalorder %s93, %s96
      %p105 = scmp.eq.s32.totalorder %s20, 1
      %p106 = por %p104, %p105
      %p107 = scmp.ne.s32.totalorder %s96, %s97
      %p108 = scmp.eq.s32.totalorder %s20, 0
      %p109 = por %p107, %p108
      %p110 = scmp.ne.s32.totalorder %s96, %s97
      %p111 = scmp.eq.s32.totalorder %s21, 1
      %p112 = por %p110, %p111
      %p114 = scmp.ne.s32.totalorder %s97, %s113
      %p115 = scmp.eq.s32.totalorder %s21, 0
      %p116 = por %p114, %p115
      %p117 = scmp.le.s32.totalorder 1, %s15
      %p118 = scmp.lt.s32.totalorder %s15, 3
      %p119 = pnand %p117, %p118
      %p120 = pneg %p119
      // Predicated region
      $region9: #{tpu_custom_call.1} parent=5 // pred_check
        _
      $region10: #{tpu_custom_call.1} parent=5 // pred_check_branch
        %122 = sbr.rel (%p119) target = $region12
      $region11: #{tpu_custom_call.1} parent=5 // pred_region
        %s123 = ssub.s32 %s15, 1
        // Predicated region
        $region13: #{tpu_custom_call.1} parent=11 // pred_check
          %p124 = pneg %p62
        $region14: #{tpu_custom_call.1} parent=11 // pred_check_branch
          %126 = sbr.rel (%p124) target = $region16
        $region15: #{tpu_custom_call.1} parent=11 // pred_region
          _
        $region16: #{tpu_custom_call.1} parent=11 // pred_fallthru
          _
        // Predicated region
        $region17: #{tpu_custom_call.1} parent=11 // pred_check
          %p127 = pneg %p83
        $region18: #{tpu_custom_call.1} parent=11 // pred_check_branch
          %129 = sbr.rel (%p127) target = $region20
        $region19: #{tpu_custom_call.1} parent=11 // pred_region
          _
        $region20: #{tpu_custom_call.1} parent=11 // pred_fallthru
          _
      $region12: #{tpu_custom_call.1} parent=5 // pred_fallthru
        _
      %p130 = scmp.lt.s32.totalorder %s15, 2
      // Predicated region
      $region21: #{tpu_custom_call.1} parent=5 // pred_check
        %p131 = pneg %p130
      $region22: #{tpu_custom_call.1} parent=5 // pred_check_branch
        %133 = sbr.rel (%p131) target = $region24
      $region23: #{tpu_custom_call.1} parent=5 // pred_region
        // Predicated region
        $region25: #{tpu_custom_call.1} parent=23 // pred_check
          %p134 = pneg %p35
        $region26: #{tpu_custom_call.1} parent=23 // pred_check_branch
          %136 = sbr.rel (%p134) target = $region28
        $region27: #{tpu_custom_call.1} parent=23 // pred_region
          %s137 = sand.u32 %s25, 1
          %s138 = scalar_lea.sflag [#allocation3], %s137
          %s139 = sand.u32 %s25, 1
          %s140 = smul.addr %s139, 8
          %s141 = scalar_lea.vmem [#allocation2], %s140
          %s143 = ssub.s32 128, 128
          %144 = vsyncadd %s138, %s143
          %s145 = smul.addr %s15, 2
          %s146 = smul.addr %s145, 64
          %s147 = scalar_lea.hbm %s0, %s146
          %s149 = sshll.u32 %s141, 4
          %s150 = int_to_ptr.vmem [resolvable:$true] %s149
          %152 = dma.hbm_to_vmem [thread:$0]  %s147, 128, %s150, %s138
        $region28: #{tpu_custom_call.1} parent=23 // pred_fallthru
          _
      $region24: #{tpu_custom_call.1} parent=5 // pred_fallthru
        _
      %p153 = scmp.le.s32.totalorder 1, %s15
      %p154 = scmp.lt.s32.totalorder %s15, 3
      %p155 = pnand %p153, %p154
      %p156 = pneg %p155
      // Predicated region
      $region29: #{tpu_custom_call.1} parent=5 // pred_check
        _
      $region30: #{tpu_custom_call.1} parent=5 // pred_check_branch
        %158 = sbr.rel (%p155) target = $region32
      $region31: #{tpu_custom_call.1} parent=5 // pred_region
        %s159 = ssub.s32 %s15, 1
        %s160 = sand.u32 %s28, 1
        %s161 = scalar_lea.sflag [#allocation3], %s160
        %s162 = sand.u32 %s28, 1
        %s163 = smul.addr %s162, 8
        %s164 = scalar_lea.vmem [#allocation2], %s163
        // Predicated region
        $region33: #{tpu_custom_call.1} parent=31 // pred_check
          %p165 = pneg %p41
        $region34: #{tpu_custom_call.1} parent=31 // pred_check_branch
          %167 = sbr.rel (%p165) target = $region36
        $region35: #{tpu_custom_call.1} parent=31 // pred_region
          %168 = dma.done %s161, 128
        $region36: #{tpu_custom_call.1} parent=31 // pred_fallthru
          _
        %s169 = sand.u32 %s28, 1
        %s170 = scalar_lea.sflag [#allocation3], %s169
        %s171 = sand.u32 %s28, 1
        %s172 = smul.addr %s171, 8
        %s173 = scalar_lea.vmem [#allocation2], %s172
        %p174 = pneg %p41
        %p175 = pneg %p38
        %p176 = pneg %p62
        %p177 = pneg %p59
        %p178 = pneg %p83
        %p179 = pneg %p80
        %p180 = pneg %p109
        %p181 = pneg %p106
        %s182 = sand.u32 %s96, 1
        %s183 = scalar_lea.sflag [#allocation4], %s182
        %s184 = sand.u32 %s96, 1
        %s185 = smul.addr %s184, 8
        %s186 = scalar_lea.vmem [#allocation5], %s185
        %v187 = vld [vmem:[%s164] sm:$0xff]
        %v189 = vrot.slane %v187, 4
        %v191 = vadd.f32 %v187, %v189
        %vm192 = vcmask 1043456
        %v193 = vsel %vm192, %v191, 0.0
        %194 = vadd.xlane.f32.xlu0 %v193
        %v195 = vpop.xlane.xlu0 %194
        %v196 = vmul.f32 %v195, 0.00390625
        %v197 = vld [vmem:[%s1] sm:$0x1]
        %vm198 = vcmask 31744
        %v200 = vsel %vm198, %v197, 0
        %v203 = vsel %vm192, %v196, 0
        %205 = vmatprep.subr.mxu0 0.0
        %206 = vmatpush1.msra.mxu0 %v203
        %207 = vmatprep.subr.mxu0 0.0
        %208 = vmatpush1.msra.mxu0 0.0
        %209 = vmatprep.subr.mxu0 0.0
        %210 = vmatpush1.msra.mxu0 0.0
        %211 = vmatprep.subr.mxu0 0.0
        %212 = vmatpush1.msra.mxu0 0.0
        %213 = vmatprep.subr.mxu0 0.0
        %214 = vmatpush1.msra.mxu0 0.0
        %215 = vmatprep.subr.mxu0 0.0
        %216 = vmatpush1.msra.mxu0 0.0
        %217 = vmatprep.subr.mxu0 0.0
        %218 = vmatpush1.msra.mxu0 0.0
        %219 = vmatprep.subr.mxu0 0.0
        %220 = vmatpush1.msra.mxu0 0.0
        %221 = vmatprep.subr.mxu0 0.0
        %222 = vmatpush1.msra.mxu0 0.0
        %223 = vmatprep.subr.mxu0 0.0
        %224 = vmatpush1.msra.mxu0 0.0
        %225 = vmatprep.subr.mxu0 0.0
        %226 = vmatpush1.msra.mxu0 0.0
        %227 = vmatprep.subr.mxu0 0.0
        %228 = vmatpush1.msra.mxu0 0.0
        %229 = vmatprep.subr.mxu0 0.0
        %230 = vmatpush1.msra.mxu0 0.0
        %231 = vmatprep.subr.mxu0 0.0
        %232 = vmatpush1.msra.mxu0 0.0
        %233 = vmatprep.subr.mxu0 0.0
        %234 = vmatpush1.msra.mxu0 0.0
        %235 = vmatprep.subr.mxu0 0.0
        %236 = vmatpush1.msra.mxu0 0.0
        %237 = vmatprep.subr.mxu0 0.0
        %238 = vmatpush1.msra.mxu0 0.0
        %239 = vmatprep.subr.mxu0 0.0
        %240 = vmatpush1.msra.mxu0 0.0
        %241 = vmatprep.subr.mxu0 0.0
        %242 = vmatpush1.msra.mxu0 0.0
        %243 = vmatprep.subr.mxu0 0.0
        %244 = vmatpush1.msra.mxu0 0.0
        %245 = vmatprep.subr.mxu0 0.0
        %246 = vmatpush1.msra.mxu0 0.0
        %247 = vmatprep.subr.mxu0 0.0
        %248 = vmatpush1.msra.mxu0 0.0
        %249 = vmatprep.subr.mxu0 0.0
        %250 = vmatpush1.msra.mxu0 0.0
        %251 = vmatprep.subr.mxu0 0.0
        %252 = vmatpush1.msra.mxu0 0.0
        %253 = vmatprep.subr.mxu0 0.0
        %254 = vmatpush1.msra.mxu0 0.0
        %255 = vmatprep.subr.mxu0 0.0
        %256 = vmatpush1.msra.mxu0 0.0
        %257 = vmatprep.subr.mxu0 0.0
        %258 = vmatpush1.msra.mxu0 0.0
        %259 = vmatprep.subr.mxu0 0.0
        %260 = vmatpush1.msra.mxu0 0.0
        %261 = vmatprep.subr.mxu0 0.0
        %262 = vmatpush1.msra.mxu0 0.0
        %263 = vmatprep.subr.mxu0 0.0
        %264 = vmatpush1.msra.mxu0 0.0
        %265 = vmatprep.subr.mxu0 0.0
        %266 = vmatpush1.msra.mxu0 0.0
        %267 = vmatprep.subr.mxu0 0.0
        %268 = vmatpush1.msra.mxu0 0.0
        %269 = vmatprep.mubr.f32.mxu0 0.0
        %270 = vmatmul.mubr.f32.gmra.mrb[0].mxu0 %v200
        %v271 = vpop.f32.mrb[0].mxu0
        %v272 = vadd.f32 0.0, %v271
        %v273 = vpop.f32.mrb[0].mxu0
        %274 = vdwg.mxu0
        %v275 = vmax.f32 %v272, 0.0
        %v276 = vld [vmem:[%s2] sm:$0xf]
        %vm277 = vcmask 7168
        %v279 = vsel %vm277, %v276, 0
        %vm281 = vcmask 1040384
        %v283 = vsel %vm281, %v275, 0
        %285 = vmatprep.subr.mxu0 0.0
        %286 = vmatpush1.msra.mxu0 %v283
        %287 = vmatprep.subr.mxu0 0.0
        %288 = vmatpush1.msra.mxu0 0.0
        %289 = vmatprep.subr.mxu0 0.0
        %290 = vmatpush1.msra.mxu0 0.0
        %291 = vmatprep.subr.mxu0 0.0
        %292 = vmatpush1.msra.mxu0 0.0
        %293 = vmatprep.subr.mxu0 0.0
        %294 = vmatpush1.msra.mxu0 0.0
        %295 = vmatprep.subr.mxu0 0.0
        %296 = vmatpush1.msra.mxu0 0.0
        %297 = vmatprep.subr.mxu0 0.0
        %298 = vmatpush1.msra.mxu0 0.0
        %299 = vmatprep.subr.mxu0 0.0
        %300 = vmatpush1.msra.mxu0 0.0
        %301 = vmatprep.subr.mxu0 0.0
        %302 = vmatpush1.msra.mxu0 0.0
        %303 = vmatprep.subr.mxu0 0.0
        %304 = vmatpush1.msra.mxu0 0.0
        %305 = vmatprep.subr.mxu0 0.0
        %306 = vmatpush1.msra.mxu0 0.0
        %307 = vmatprep.subr.mxu0 0.0
        %308 = vmatpush1.msra.mxu0 0.0
        %309 = vmatprep.subr.mxu0 0.0
        %310 = vmatpush1.msra.mxu0 0.0
        %311 = vmatprep.subr.mxu0 0.0
        %312 = vmatpush1.msra.mxu0 0.0
        %313 = vmatprep.subr.mxu0 0.0
        %314 = vmatpush1.msra.mxu0 0.0
        %315 = vmatprep.subr.mxu0 0.0
        %316 = vmatpush1.msra.mxu0 0.0
        %317 = vmatprep.subr.mxu0 0.0
        %318 = vmatpush1.msra.mxu0 0.0
        %319 = vmatprep.subr.mxu0 0.0
        %320 = vmatpush1.msra.mxu0 0.0
        %321 = vmatprep.subr.mxu0 0.0
        %322 = vmatpush1.msra.mxu0 0.0
        %323 = vmatprep.subr.mxu0 0.0
        %324 = vmatpush1.msra.mxu0 0.0
        %325 = vmatprep.subr.mxu0 0.0
        %326 = vmatpush1.msra.mxu0 0.0
        %327 = vmatprep.subr.mxu0 0.0
        %328 = vmatpush1.msra.mxu0 0.0
        %329 = vmatprep.subr.mxu0 0.0
        %330 = vmatpush1.msra.mxu0 0.0
        %331 = vmatprep.subr.mxu0 0.0
        %332 = vmatpush1.msra.mxu0 0.0
        %333 = vmatprep.subr.mxu0 0.0
        %334 = vmatpush1.msra.mxu0 0.0
        %335 = vmatprep.subr.mxu0 0.0
        %336 = vmatpush1.msra.mxu0 0.0
        %337 = vmatprep.subr.mxu0 0.0
        %338 = vmatpush1.msra.mxu0 0.0
        %339 = vmatprep.subr.mxu0 0.0
        %340 = vmatpush1.msra.mxu0 0.0
        %341 = vmatprep.subr.mxu0 0.0
        %342 = vmatpush1.msra.mxu0 0.0
        %343 = vmatprep.subr.mxu0 0.0
        %344 = vmatpush1.msra.mxu0 0.0
        %345 = vmatprep.subr.mxu0 0.0
        %346 = vmatpush1.msra.mxu0 0.0
        %347 = vmatprep.subr.mxu0 0.0
        %348 = vmatpush1.msra.mxu0 0.0
        %349 = vmatprep.mubr.f32.mxu0 0.0
        %350 = vmatmul.mubr.f32.gmra.mrb[0].mxu0 %v279
        %v351 = vpop.f32.mrb[0].mxu0
        %v352 = vadd.f32 0.0, %v351
        %v353 = vpop.f32.mrb[0].mxu0
        %354 = vdwg.mxu0
        %v355 = vxor.u32 %v352, 2147483648
        %v356 = vmul.f32 %v355, 1.442695
        %v357 = vpow.pop %v356
        %v358 = vadd.f32 %v357, 1.0
        %v359 = vrcp.pop %v358
        %v360 = vmul.f32 1.0, %v359
        %v361 = vadd.f32 %v360, 1.0
        %363 = vset.pattern.permute.xlu0 0
        %364 = vperm.xlu0 %363, %v361
        %v365 = vpop.permute.xlu0 %364
        %v367 = vunpack.c.l.s4 839922192
        %v368 = vunpack.c.0.s8 %v367
        %v369 = vlaneseq
        %v370 = vshrl.u32 %v369, 7
        %v371 = vsub.s32 %v368, %v370
        %v372 = vrot.slane %v365, %v371
        %v374 = vmul.f32 %v187, %v372
        %375 = vst [vmem:[%s186] sm:$0xff] %v374
        %s376 = sand.u32 %s96, 1
        %s377 = scalar_lea.sflag [#allocation4], %s376
        %s378 = sand.u32 %s96, 1
        %s379 = smul.addr %s378, 8
        %s380 = scalar_lea.vmem [#allocation5], %s379
        // Predicated region
        $region37: #{tpu_custom_call.1} parent=31 // pred_check
          %p381 = pneg %p106
        $region38: #{tpu_custom_call.1} parent=31 // pred_check_branch
          %383 = sbr.rel (%p381) target = $region40
        $region39: #{tpu_custom_call.1} parent=31 // pred_region
          %s385 = ssub.s32 128, 128
          %386 = vsyncadd %s377, %s385
          %s387 = smul.addr %s20, 2
          %s388 = smul.addr %s387, 64
          %s389 = scalar_lea.hbm %s3, %s388
          %s391 = sshll.u32 %s380, 4
          %s392 = int_to_ptr.vmem [resolvable:$true] %s391
          %394 = dma.vmem_to_hbm [thread:$0]  %s392, 128, %s389, %s377
        $region40: #{tpu_custom_call.1} parent=31 // pred_fallthru
          _
      $region32: #{tpu_custom_call.1} parent=5 // pred_fallthru
        _
      %p395 = scmp.le.s32.totalorder 2, %s15
      // Predicated region
      $region41: #{tpu_custom_call.1} parent=5 // pred_check
        %p396 = pneg %p395
      $region42: #{tpu_custom_call.1} parent=5 // pred_check_branch
        %398 = sbr.rel (%p396) target = $region44
      $region43: #{tpu_custom_call.1} parent=5 // pred_region
        %s399 = ssub.s32 %s15, 2
        // Predicated region
        $region45: #{tpu_custom_call.1} parent=43 // pred_check
          %p400 = pneg %p112
        $region46: #{tpu_custom_call.1} parent=43 // pred_check_branch
          %402 = sbr.rel (%p400) target = $region48
        $region47: #{tpu_custom_call.1} parent=43 // pred_region
          %s403 = sand.u32 %s97, 1
          %s404 = scalar_lea.sflag [#allocation4], %s403
          %s405 = sand.u32 %s97, 1
          %s406 = smul.addr %s405, 8
          %s407 = scalar_lea.vmem [#allocation5], %s406
          %408 = dma.done %s404, 128
        $region48: #{tpu_custom_call.1} parent=43 // pred_fallthru
          _
      $region44: #{tpu_custom_call.1} parent=5 // pred_fallthru
        _
    $region6: #{tpu_custom_call.1} parent=1 // loop_footer
      %s19 = sadd.s32 1, %s15
    $region7: #{tpu_custom_call.1} parent=1 // loop_footer_branch
      %14 = sbr.rel target = $region3
    $region8: #{tpu_custom_call.1} parent=1 // loop_exit
      _
    %409 = vsyncpa [#allocation3], 1
    %s410 = scalar_lea.sflag [#allocation3], 1
    %411 = vsyncpa %s410, 1
    %412 = vsyncpa [#allocation4], 1
    %s413 = scalar_lea.sflag [#allocation4], 1
    %414 = vsyncpa %s413, 1

</llo_original>
